<compile_context>
chip_gen: v5e
topology: v5e:2x2
jax: 0.10.0
libtpu: 0.0.40
codegen_flags: <defaults>
</compile_context>

<pallas_src>
import functools

import jax
import jax.numpy as jnp
from jax.experimental import pallas as pl
from jax.experimental.pallas import tpu as pltpu


# ----------------------------------------------------------------------------
# Fused MLP kernel.
#   refs = [x,
#           W_0, b_0, ..., W_{H-1}, b_{H-1},      # hidden layers (ReLU), VMEM
#           w_last_row, b_last,                   # final layer: (1, Dh) VMEM row,
#                                                 #              (1, 1) SMEM scalar
#           out]                                  # (B, 1) VMEM
# Hidden matmuls use the MXU (f32 accumulate); the Dout=1 final layer is done
# as a VPU lane reduction (no N=1 matmul); sigmoid uses exp (EUP) + approx
# reciprocal (EUP), keeping the VALU slot free.
# ----------------------------------------------------------------------------
def _mlp_fused_kernel(*refs, n_hidden_layers):
    x_ref = refs[0]
    o_ref = refs[-1]

    h = x_ref[...]
    idx = 1
    for _ in range(n_hidden_layers):
        w_ref = refs[idx]
        b_ref = refs[idx + 1]          # (1, Dh) -> broadcasts over batch
        idx += 2
        h = jnp.dot(h, w_ref[...], preferred_element_type=jnp.float32) + b_ref[...]
        h = jnp.maximum(h, 0.0)

    w_last_ref = refs[idx]             # (1, D_last) lane-dense row vector
    b_last_ref = refs[idx + 1]         # (1, 1) scalar in SMEM

    # Final Dout=1 layer as a lane reduction on the VPU/XLU (avoids an N=1 MXU op).
    y = jnp.sum(h * w_last_ref[...], axis=-1, keepdims=True) + b_last_ref[0, 0]

    # sigmoid = 1 / (1 + exp(-y)); exp and approx reciprocal both land on the EUP.
    y = pl.reciprocal(1.0 + jnp.exp(-y), approx=True)

    o_ref[...] = y.astype(o_ref.dtype)


def classifier_forward(params, x):
    """Fused forward pass: hidden layers ReLU, final layer Sigmoid -> (B, 1)."""
    *hidden, (w_last, b_last) = params
    B = x.shape[0]

    inputs = [x]
    in_specs = [pl.BlockSpec(memory_space=pltpu.MemorySpace.VMEM)]
    for (W, b) in hidden:
        inputs += [W, b.reshape(1, -1)]
        in_specs += [pl.BlockSpec(memory_space=pltpu.MemorySpace.VMEM),
                     pl.BlockSpec(memory_space=pltpu.MemorySpace.VMEM)]

    # Final layer: store weight as a lane-dense (1, D_last) row; bias is a true
    # scalar so it goes through SMEM (scalar path), not a masked VMEM lane load.
    inputs += [w_last.reshape(1, -1), b_last.reshape(1, 1)]
    in_specs += [pl.BlockSpec(memory_space=pltpu.MemorySpace.VMEM),
                 pl.BlockSpec(memory_space=pltpu.MemorySpace.SMEM)]

    kernel = functools.partial(_mlp_fused_kernel, n_hidden_layers=len(hidden))

    # TODO(synk): if batch/feature sizes grow, add a ("parallel",) grid over the
    # batch dim with (8,128)-aligned tiles, keep weights resident in VMEM
    # scratch, and cast weights/activations to bf16 (f32 accumulate).
    return pl.pallas_call(
        kernel,
        out_shape=jax.ShapeDtypeStruct((B, 1), jnp.float32),
        in_specs=in_specs,
        out_specs=pl.BlockSpec(memory_space=pltpu.MemorySpace.VMEM),
    )(*inputs)


# ----------------------------------------------------------------------------
# Parameter init (matches nn.Linear default: U(-1/sqrt(fan_in), 1/sqrt(fan_in)))
# ----------------------------------------------------------------------------
def init_classifier_params(key, n_layers, n_inputs, n_hidden_units):
    """Returns list of (W_(in,out), b_(out,)) mirroring the PyTorch module."""
    dims = []
    if n_layers == 1:
        dims.append((n_inputs, 1))
    else:
        dims.append((n_inputs, n_hidden_units))
        for _ in range(n_layers - 2):
            dims.append((n_hidden_units, n_hidden_units))
        dims.append((n_hidden_units, 1))

    params = []
    for (din, dout) in dims:
        key, kw, kb = jax.random.split(key, 3)
        bound = 1.0 / jnp.sqrt(jnp.float32(din))
        W = jax.random.uniform(kw, (din, dout), jnp.float32, -bound, bound)
        b = jax.random.uniform(kb, (dout,), jnp.float32, -bound, bound)
        params.append((W, b))
    return params


# ----------------------------------------------------------------------------
# Pure-JAX reference for sanity check
# ----------------------------------------------------------------------------
def classifier_ref(params, x):
    n = len(params)
    h = x
    for i, (W, b) in enumerate(params):
        h = h @ W + b
        if i == n - 1:
            h = 1.0 / (1.0 + jnp.exp(-h))
        else:
            h = jnp.maximum(h, 0.0)
    return h


if __name__ == "__main__":
    batch = 8
    n_inputs = 32
    n_hidden_units = 32

    key = jax.random.PRNGKey(0)
    key, kx = jax.random.split(key)
    x = jax.random.normal(kx, (batch, n_inputs), jnp.float32)

    # Multi-layer case (3 layers: Linear+ReLU, Linear+ReLU, Linear+Sigmoid)
    key, kp = jax.random.split(key)
    params3 = init_classifier_params(kp, 3, n_inputs, n_hidden_units)
    out3 = jax.block_until_ready(classifier_forward(params3, x))
    ref3 = classifier_ref(params3, x)
    assert out3.shape == (batch, 1), out3.shape
    assert jnp.allclose(out3, ref3, atol=2e-3, rtol=2e-3), (out3, ref3)

    # Single-layer case (Linear+Sigmoid only) exercises the zero-hidden path.
    key, kp1 = jax.random.split(key)
    params1 = init_classifier_params(kp1, 1, n_inputs, n_hidden_units)
    out1 = jax.block_until_ready(classifier_forward(params1, x))
    ref1 = classifier_ref(params1, x)
    assert out1.shape == (batch, 1), out1.shape
    assert jnp.allclose(out1, ref1, atol=2e-3, rtol=2e-3), (out1, ref1)

    print("KERNEL_OK")
</pallas_src>

<mosaic_0001>
module attributes {stable_mosaic.version = 11 : i64} {
  func.func @_mlp_fused_kernel(%arg0: memref<8x32xf32, #tpu.memory_space<vmem>>, %arg1: memref<32x32xf32, #tpu.memory_space<vmem>>, %arg2: memref<1x32xf32, #tpu.memory_space<vmem>>, %arg3: memref<32x32xf32, #tpu.memory_space<vmem>>, %arg4: memref<1x32xf32, #tpu.memory_space<vmem>>, %arg5: memref<1x32xf32, #tpu.memory_space<vmem>>, %arg6: memref<1x1xf32, #tpu.memory_space<smem>>, %arg7: memref<8x1xf32, #tpu.memory_space<vmem>>) attributes {dimension_semantics = [], scalar_prefetch = 0 : i64, scratch_operands = 0 : i64, tpu.core_type = #tpu.core_type<tc>} {
    %c0 = arith.constant 0 : index
    %c0_0 = arith.constant 0 : index
    %0 = vector.load %arg0[%c0, %c0_0] : memref<8x32xf32, #tpu.memory_space<vmem>>, vector<8x32xf32>
    %c0_1 = arith.constant 0 : index
    %c0_2 = arith.constant 0 : index
    %1 = vector.load %arg1[%c0_1, %c0_2] : memref<32x32xf32, #tpu.memory_space<vmem>>, vector<32x32xf32>
    %cst = arith.constant dense<0.000000e+00> : vector<8x32xf32>
    %2 = tpu.matmul %0, %1, %cst {dimension_numbers = #tpu.dot_dimension_numbers<[1], [0], [0], [1], [0, 0, 1, 1], [], []>} : vector<8x32xf32>, vector<32x32xf32>, vector<8x32xf32> -> vector<8x32xf32>
    %c0_3 = arith.constant 0 : index
    %c0_4 = arith.constant 0 : index
    %3 = vector.load %arg2[%c0_3, %c0_4] : memref<1x32xf32, #tpu.memory_space<vmem>>, vector<1x32xf32>
    %4 = vector.broadcast %3 : vector<1x32xf32> to vector<8x32xf32>
    %5 = arith.addf %2, %4 : vector<8x32xf32>
    %cst_5 = arith.constant 0.000000e+00 : f32
    %6 = vector.broadcast %cst_5 : f32 to vector<8x32xf32>
    %7 = arith.maximumf %5, %6 : vector<8x32xf32>
    %c0_6 = arith.constant 0 : index
    %c0_7 = arith.constant 0 : index
    %8 = vector.load %arg3[%c0_6, %c0_7] : memref<32x32xf32, #tpu.memory_space<vmem>>, vector<32x32xf32>
    %cst_8 = arith.constant dense<0.000000e+00> : vector<8x32xf32>
    %9 = tpu.matmul %7, %8, %cst_8 {dimension_numbers = #tpu.dot_dimension_numbers<[1], [0], [0], [1], [0, 0, 1, 1], [], []>} : vector<8x32xf32>, vector<32x32xf32>, vector<8x32xf32> -> vector<8x32xf32>
    %c0_9 = arith.constant 0 : index
    %c0_10 = arith.constant 0 : index
    %10 = vector.load %arg4[%c0_9, %c0_10] : memref<1x32xf32, #tpu.memory_space<vmem>>, vector<1x32xf32>
    %11 = vector.broadcast %10 : vector<1x32xf32> to vector<8x32xf32>
    %12 = arith.addf %9, %11 : vector<8x32xf32>
    %cst_11 = arith.constant 0.000000e+00 : f32
    %13 = vector.broadcast %cst_11 : f32 to vector<8x32xf32>
    %14 = arith.maximumf %12, %13 : vector<8x32xf32>
    %c0_12 = arith.constant 0 : index
    %c0_13 = arith.constant 0 : index
    %15 = vector.load %arg5[%c0_12, %c0_13] : memref<1x32xf32, #tpu.memory_space<vmem>>, vector<1x32xf32>
    %16 = vector.broadcast %15 : vector<1x32xf32> to vector<8x32xf32>
    %17 = arith.mulf %14, %16 : vector<8x32xf32>
    %cst_14 = arith.constant dense<0.000000e+00> : vector<8xf32>
    %18 = vector.multi_reduction <add>, %17, %cst_14 [1] : vector<8x32xf32> to vector<8xf32>
    %19 = vector.shape_cast %18 : vector<8xf32> to vector<8x1xf32>
    %c0_15 = arith.constant 0 : index
    %c0_16 = arith.constant 0 : index
    %20 = memref.load %arg6[%c0_15, %c0_16] : memref<1x1xf32, #tpu.memory_space<smem>>
    %21 = vector.broadcast %20 : f32 to vector<8x1xf32>
    %22 = arith.addf %19, %21 : vector<8x1xf32>
    %cst_17 = arith.constant 0.000000e+00 : f32
    %23 = vector.broadcast %cst_17 : f32 to vector<8x1xf32>
    %24 = arith.subf %23, %22 : vector<8x1xf32>
    %25 = math.exp %24 : vector<8x1xf32>
    %cst_18 = arith.constant 1.000000e+00 : f32
    %26 = vector.broadcast %cst_18 : f32 to vector<8x1xf32>
    %27 = arith.addf %26, %25 : vector<8x1xf32>
    %28 = tpu.reciprocal %27 {approx = true} : vector<8x1xf32> -> vector<8x1xf32>
    %c0_19 = arith.constant 0 : index
    %c0_20 = arith.constant 0 : index
    %29 = vector.load %arg7[%c0_19, %c0_20] : memref<8x1xf32, #tpu.memory_space<vmem>>, vector<8x1xf32>
    tpu.vector_store %arg7[%c0_19, %c0_20], %28 {strides = array<i32>} : memref<8x1xf32, #tpu.memory_space<vmem>>, vector<8x1xf32>,
    return
  }
}

</mosaic_0001>

<llo_original>
// kernel: tpu_custom_call.1
$region0: #{tpu_custom_call.1}
  #allocation0 [shape = 'u32[]', space=smem, size = 0x4, offset = 0x4, fixed_abs, tag = 'smem constant byte address 0x4 - core index']
  #allocation1 [shape = 'u32[72,128]{1,0:T(1,128)}', space=vmem, size = 0x9000, scoped, tag = 'internal scratch']
  #allocation2 [shape = 'f32[1,1]{1,0:T(1,128)S(6)}', space=smem, size = 0x200, scoped, tag = 'scoped memory for tpu_custom_call.1']
  %s0 = inlined_call_operand.hbm [shape: f32[8,32], index: 0, kind: input, shape index: {}]
  %s1 = inlined_call_operand.hbm [shape: f32[32,32], index: 1, kind: input, shape index: {}]
  %s2 = inlined_call_operand.vmem [shape: f32[1,32], index: 2, kind: input, shape index: {}]
  %s3 = inlined_call_operand.hbm [shape: f32[32,32], index: 3, kind: input, shape index: {}]
  %s4 = inlined_call_operand.vmem [shape: f32[1,32], index: 4, kind: input, shape index: {}]
  %s5 = inlined_call_operand.vmem [shape: f32[1,32], index: 5, kind: input, shape index: {}]
  %s6 = inlined_call_operand.<no memory space> [shape: f32[1,1], index: 6, kind: input, shape index: {}]
  %s7 = inlined_call_operand.vmem [shape: f32[8,1], index: 7, kind: output, shape index: {}]
  %s8 = sld [smem:[#allocation0]]
  $region50: #{tpu_custom_call.1} parent=0
    _
  %s10 = ssub.s32 1, %s8
  %s11 = scalar_select 0, %s10, %s8
  %12 = sst [smem:[#allocation2]] %s6
  $region1: #{tpu_custom_call.1} parent=0
    #allocation3 [shape = 'u8[4096]{0}', space=vmem, size = 0x1000, scoped, tag = 'input window, operand 0, single buffered']
    #allocation4 [shape = 's32[1]{0}', space=sflag, size = 0x4, scoped, tag = 'scoped memory for tpu_custom_call.1']
    #allocation5 [shape = 'u8[16384]{0}', space=vmem, size = 0x4000, scoped, tag = 'input window, operand 1, single buffered']
    #allocation6 [shape = 's32[1]{0}', space=sflag, size = 0x4, scoped, tag = 'scoped memory for tpu_custom_call.1']
    #allocation7 [shape = 'u8[16384]{0}', space=vmem, size = 0x4000, scoped, tag = 'input window, operand 3, single buffered']
    %13 = vsyncpa [#allocation4], 0
    %14 = vsyncpa [#allocation6], 0
    // Predicated region
    $region2: #{tpu_custom_call.1} parent=1 // pred_check
      _
    $region3: #{tpu_custom_call.1} parent=1 // pred_check_branch
      %16 = sbr.rel (0) target = $region5
    $region4: #{tpu_custom_call.1} parent=1 // pred_region
      %18 = vsyncadd [#allocation4], 0
      %s20 = sshll.u32 %s0, 4
      %s21 = int_to_ptr.hbm [resolvable:$true] %s20
      %s22 = sshll.u32 [#allocation3], 4
      %s23 = int_to_ptr.vmem [resolvable:$true] %s22
      %25 = dma.hbm_to_vmem [thread:$0]  %s21, 128, %s23, [#allocation4]
    $region5: #{tpu_custom_call.1} parent=1 // pred_fallthru
      _
    // Predicated region
    $region6: #{tpu_custom_call.1} parent=1 // pred_check
      _
    $region7: #{tpu_custom_call.1} parent=1 // pred_check_branch
      %27 = sbr.rel (0) target = $region9
    $region8: #{tpu_custom_call.1} parent=1 // pred_region
      %29 = vsyncadd [#allocation6], 0
      %s30 = sshll.u32 %s1, 4
      %s31 = int_to_ptr.hbm [resolvable:$true] %s30
      %s32 = sshll.u32 [#allocation5], 4
      %s33 = int_to_ptr.vmem [resolvable:$true] %s32
      %38 = dma.hbm_to_vmem [thread:$0]  %s31, 512, %s33, [#allocation6], 128, 128, 8
    $region9: #{tpu_custom_call.1} parent=1 // pred_fallthru
      _
    // Predicated region
    $region10: #{tpu_custom_call.1} parent=1 // pred_check
      _
    $region11: #{tpu_custom_call.1} parent=1 // pred_check_branch
      %40 = sbr.rel (0) target = $region13
    $region12: #{tpu_custom_call.1} parent=1 // pred_region
      _
    $region13: #{tpu_custom_call.1} parent=1 // pred_fallthru
      _
    // Predicated region
    $region14: #{tpu_custom_call.1} parent=1 // pred_check
      _
    $region15: #{tpu_custom_call.1} parent=1 // pred_check_branch
      %42 = sbr.rel (0) target = $region17
    $region16: #{tpu_custom_call.1} parent=1 // pred_region
      %44 = vsyncadd [#allocation6], 0
      %s45 = sshll.u32 %s3, 4
      %s46 = int_to_ptr.hbm [resolvable:$true] %s45
      %s47 = sshll.u32 [#allocation7], 4
      %s48 = int_to_ptr.vmem [resolvable:$true] %s47
      %53 = dma.hbm_to_vmem [thread:$0]  %s46, 512, %s48, [#allocation6], 128, 128, 8
    $region17: #{tpu_custom_call.1} parent=1 // pred_fallthru
      _
    // Predicated region
    $region18: #{tpu_custom_call.1} parent=1 // pred_check
      _
    $region19: #{tpu_custom_call.1} parent=1 // pred_check_branch
      %55 = sbr.rel (0) target = $region21
    $region20: #{tpu_custom_call.1} parent=1 // pred_region
      _
    $region21: #{tpu_custom_call.1} parent=1 // pred_fallthru
      _
    // Predicated region
    $region22: #{tpu_custom_call.1} parent=1 // pred_check
      _
    $region23: #{tpu_custom_call.1} parent=1 // pred_check_branch
      %57 = sbr.rel (0) target = $region25
    $region24: #{tpu_custom_call.1} parent=1 // pred_region
      _
    $region25: #{tpu_custom_call.1} parent=1 // pred_fallthru
      _
    // Predicated region
    $region26: #{tpu_custom_call.1} parent=1 // pred_check
      _
    $region27: #{tpu_custom_call.1} parent=1 // pred_check_branch
      %59 = sbr.rel (0) target = $region29
    $region28: #{tpu_custom_call.1} parent=1 // pred_region
      _
    $region29: #{tpu_custom_call.1} parent=1 // pred_fallthru
      _
    // Predicated region
    $region30: #{tpu_custom_call.1} parent=1 // pred_check
      _
    $region31: #{tpu_custom_call.1} parent=1 // pred_check_branch
      %61 = sbr.rel (0) target = $region33
    $region32: #{tpu_custom_call.1} parent=1 // pred_region
      %63 = dma.done [#allocation4], 128
    $region33: #{tpu_custom_call.1} parent=1 // pred_fallthru
      _
    // Predicated region
    $region34: #{tpu_custom_call.1} parent=1 // pred_check
      _
    $region35: #{tpu_custom_call.1} parent=1 // pred_check_branch
      %65 = sbr.rel (0) target = $region37
    $region36: #{tpu_custom_call.1} parent=1 // pred_region
      %67 = dma.done [#allocation6], 512
    $region37: #{tpu_custom_call.1} parent=1 // pred_fallthru
      _
    // Predicated region
    $region38: #{tpu_custom_call.1} parent=1 // pred_check
      _
    $region39: #{tpu_custom_call.1} parent=1 // pred_check_branch
      %69 = sbr.rel (0) target = $region41
    $region40: #{tpu_custom_call.1} parent=1 // pred_region
      %71 = dma.done [#allocation6], 512
    $region41: #{tpu_custom_call.1} parent=1 // pred_fallthru
      _
    %v72 = vld [vmem:[#allocation3] sm:$0xff]
    %v73 = vld [vmem:[#allocation5] sm:$0xff]
    %v74 = vld [vmem:[#allocation5 + $0x8] sm:$0xff]
    %v75 = vld [vmem:[#allocation5 + $0x10] sm:$0xff]
    %v76 = vld [vmem:[#allocation5 + $0x18] sm:$0xff]
    %v77 = vld [vmem:[%s2] sm:$0x1]
    %v79 = vperm.slane %v77, 0
    %vm81 = vcmask 261120
    %v83 = vsel %vm81, %v72, 0
    %85 = vmatpush.msra.mxu0 0.0
    %86 = vmatpush.msra.mxu0 0.0
    %87 = vmatpush.msra.mxu0 0.0
    %88 = vmatpush.msra.mxu0 0.0
    %89 = vmatpush.msra.mxu0 0.0
    %90 = vmatpush.msra.mxu0 0.0
    %91 = vmatpush.msra.mxu0 0.0
    %92 = vmatpush.msra.mxu0 0.0
    %93 = vmatpush.msra.mxu0 0.0
    %94 = vmatpush.msra.mxu0 0.0
    %95 = vmatpush.msra.mxu0 0.0
    %96 = vmatpush.msra.mxu0 0.0
    %97 = vmatpush.msra.mxu0 %v76
    %98 = vmatpush.msra.mxu0 %v75
    %99 = vmatpush.msra.mxu0 %v74
    %100 = vmatpush.msra.mxu0 %v73
    %101 = vmatmul.f32.gmra.mxu0 %v83
    %v102 = vpop.f32.mrf.mxu0
    %v103 = vadd.f32 %v79, %v102
    %104 = vdwg.mxu0
    %v105 = vmax.f32 %v103, 0.0
    %v106 = vld [vmem:[#allocation7] sm:$0xff]
    %v107 = vld [vmem:[#allocation7 + $0x8] sm:$0xff]
    %v108 = vld [vmem:[#allocation7 + $0x10] sm:$0xff]
    %v109 = vld [vmem:[#allocation7 + $0x18] sm:$0xff]
    %v110 = vld [vmem:[%s4] sm:$0x1]
    %v112 = vperm.slane %v110, 0
    %v115 = vsel %vm81, %v105, 0
    %117 = vmatpush.msra.mxu0 0.0
    %118 = vmatpush.msra.mxu0 0.0
    %119 = vmatpush.msra.mxu0 0.0
    %120 = vmatpush.msra.mxu0 0.0
    %121 = vmatpush.msra.mxu0 0.0
    %122 = vmatpush.msra.mxu0 0.0
    %123 = vmatpush.msra.mxu0 0.0
    %124 = vmatpush.msra.mxu0 0.0
    %125 = vmatpush.msra.mxu0 0.0
    %126 = vmatpush.msra.mxu0 0.0
    %127 = vmatpush.msra.mxu0 0.0
    %128 = vmatpush.msra.mxu0 0.0
    %129 = vmatpush.msra.mxu0 %v109
    %130 = vmatpush.msra.mxu0 %v108
    %131 = vmatpush.msra.mxu0 %v107
    %132 = vmatpush.msra.mxu0 %v106
    %133 = vmatmul.f32.gmra.mxu0 %v115
    %v134 = vpop.f32.mrf.mxu0
    %v135 = vadd.f32 %v112, %v134
    %136 = vdwg.mxu0
    %v137 = vmax.f32 %v135, 0.0
    %v138 = vld [vmem:[%s5] sm:$0x1]
    %v140 = vperm.slane %v138, 0
    %v142 = vmul.f32 %v137, %v140
    %v143 = vsel %vm81, %v142, 0.0
    %144 = vadd.xlane.f32.xlu0 %v143
    %v145 = vpop.xlane.xlu0 %144
    %s146 = sld [smem:[#allocation2]]
    %v147 = vstv %s146
    %v148 = vadd.f32 %v145, %v147
    %v149 = vsub.f32 0.0, %v148
    %v150 = vmul.f32 %v149, 1.442695
    %v151 = vpow.pop %v150
    %v152 = vadd.f32 %v151, 1.0
    %v153 = vrcp.pop %v152
    %vm154 = vcmask 7168
    %155 = vst.msk [vmem:[%s7] sm:$0xff] %vm154, %v153
    // Predicated region
    $region42: #{tpu_custom_call.1} parent=1 // pred_check
      _
    $region43: #{tpu_custom_call.1} parent=1 // pred_check_branch
      %157 = sbr.rel (0) target = $region45
    $region44: #{tpu_custom_call.1} parent=1 // pred_region
      _
    $region45: #{tpu_custom_call.1} parent=1 // pred_fallthru
      _
    // Predicated region
    $region46: #{tpu_custom_call.1} parent=1 // pred_check
      _
    $region47: #{tpu_custom_call.1} parent=1 // pred_check_branch
      %159 = sbr.rel (0) target = $region49
    $region48: #{tpu_custom_call.1} parent=1 // pred_region
      _
    $region49: #{tpu_custom_call.1} parent=1 // pred_fallthru
      _
    %160 = vsyncpa [#allocation4], 1
    %161 = vsyncpa [#allocation6], 1

</llo_original>
